<compile_context>
chip_gen: v5e
topology: v5e:2x2
jax: 0.10.0
libtpu: 0.0.40
codegen_flags: <defaults>
</compile_context>

<pallas_src>
import functools

import jax
import jax.numpy as jnp
from jax.experimental import pallas as pl
from jax.experimental.pallas import tpu as pltpu

_LANE = 128
_SUB = 8


# --------------------------------------------------------------------------- #
# Kernels
# --------------------------------------------------------------------------- #
def _dwconv_kernel(x_ref, w_ref, b_ref, o_ref, *, kernel_size, crop):
    """Single-seq-tile path: the whole sequence is resident in the block."""
    s_blk, _ = x_ref.shape
    x = x_ref[...].astype(jnp.float32)

    # Bias + center tap fused into the accumulator init.
    acc = x * w_ref[crop, :].astype(jnp.float32)[None, :] + b_ref[...].astype(jnp.float32)

    if kernel_size > 1:
        row = jax.lax.broadcasted_iota(jnp.int32, (s_blk, 1), 0)
        for j in range(kernel_size):                     # static, unrolled
            if j == crop:
                continue
            shift = crop - j                             # +: look back, -: look ahead
            rot = shift % s_blk
            rolled = x if rot == 0 else pltpu.roll(x, shift=rot, axis=0)
            valid = (row >= shift) if shift > 0 else (row < s_blk + shift)
            w_j = w_ref[j, :].astype(jnp.float32)[None, :]
            acc = acc + jnp.where(valid, rolled, 0.0) * w_j

    o_ref[...] = acc.astype(o_ref.dtype)


def _dwconv_halo_kernel(x_ref, xp_ref, xn_ref, w_ref, b_ref, o_ref, *, kernel_size, crop):
    """Seq-tiled path: (TS, TC) tile plus 8-row halos from the neighbour tiles."""
    ts, tc = x_ref.shape
    f32 = jnp.float32
    s_id = pl.program_id(1)
    n_s = pl.num_programs(1)

    x = x_ref[...].astype(f32)
    acc = x * w_ref[crop, :].astype(f32)[None, :] + b_ref[...].astype(f32)

    row = jax.lax.broadcasted_iota(jnp.int32, (ts, 1), 0)
    for j in range(kernel_size):                         # static, unrolled
        if j == crop:
            continue
        shift = crop - j
        rot = shift % ts
        rolled = x if rot == 0 else pltpu.roll(x, shift=rot, axis=0)
        valid = (row >= shift) if shift > 0 else (row < ts + shift)
        acc = acc + jnp.where(valid, rolled, 0.0) * w_ref[j, :].astype(f32)[None, :]

    # Halo fix-up: only the first / last `crop` (<= 8) rows need data from the
    # neighbouring seq tiles.  Build tiny (8, TC) corrections and fold them into
    # the edge stores.  At the global sequence ends the correction is zeroed,
    # matching the conv's zero padding.
    row8 = jax.lax.broadcasted_iota(jnp.int32, (_SUB, 1), 0)
    prev8 = xp_ref[...].astype(f32)      # last 8 rows of the previous seq tile
    next8 = xn_ref[...].astype(f32)      # first 8 rows of the next seq tile
    top = jnp.zeros((_SUB, tc), f32)
    bot = jnp.zeros((_SUB, tc), f32)
    for j in range(crop):                                # taps that look backwards
        shift = crop - j
        rot = shift % _SUB
        r = prev8 if rot == 0 else pltpu.roll(prev8, shift=rot, axis=0)
        top = top + jnp.where(row8 < shift, r, 0.0) * w_ref[j, :].astype(f32)[None, :]
    for j in range(crop + 1, kernel_size):               # taps that look forwards
        shift = crop - j
        rot = shift % _SUB
        r = next8 if rot == 0 else pltpu.roll(next8, shift=rot, axis=0)
        bot = bot + jnp.where(row8 >= _SUB + shift, r, 0.0) * w_ref[j, :].astype(f32)[None, :]
    top = top * (s_id > 0).astype(f32)
    bot = bot * (s_id < n_s - 1).astype(f32)

    o_ref[0:_SUB, :] = (acc[0:_SUB, :] + top).astype(o_ref.dtype)
    if ts > 2 * _SUB:
        o_ref[_SUB:ts - _SUB, :] = acc[_SUB:ts - _SUB, :].astype(o_ref.dtype)
    o_ref[ts - _SUB:ts, :] = (acc[ts - _SUB:ts, :] + bot).astype(o_ref.dtype)


# --------------------------------------------------------------------------- #
# Tiling heuristics (per TPU generation)
# --------------------------------------------------------------------------- #
def _round_down(v: int, m: int) -> int:
    return (v // m) * m


@functools.lru_cache(maxsize=1)
def _chip_profile():
    """(target_block_bytes, physical_vmem_bytes, multi_tensorcore)."""
    vmem_cap = None
    try:
        vmem_cap = int(pltpu.get_tpu_info().vmem_capacity_bytes)
    except Exception:
        vmem_cap = None
    kind = ""
    try:
        kind = jax.devices()[0].device_kind.lower()
    except Exception:
        pass
    if vmem_cap is None:
        vmem_cap = (64 << 20) if "7" in kind else (128 << 20)  # v7x: 64 MiB / TC
    small_vmem = vmem_cap <= (64 << 20)
    multi_tc = small_vmem or ("7" in kind)                     # v7x: 2 TCs / chip
    target_block_bytes = (2 << 20) if small_vmem else (4 << 20)
    return target_block_bytes, vmem_cap, multi_tc


def _pick_channel_tile(rows, n_channels, itemsize, target_bytes):
    if n_channels <= _LANE:
        return n_channels                                      # full (sub-128) lane extent
    max_tc = _round_down(n_channels, _LANE)
    tc = _round_down(target_bytes // max(1, rows * itemsize), _LANE)
    return max(_LANE, min(tc, max_tc))


def _pick_seq_tile(seq_len, max_rows):
    t = _round_down(min(seq_len, max_rows), _SUB)
    while t >= 2 * _SUB:
        if seq_len % t == 0:
            return t
        t -= _SUB
    return None


# --------------------------------------------------------------------------- #
# Wrapper
# --------------------------------------------------------------------------- #
@functools.partial(jax.jit, static_argnames=("kernel_size", "seq_block"))
def spatial_depthwise_conv(x, weight, bias, *, kernel_size: int = 3, seq_block=None):
    """x: (seq_len, batch, heads, d_k); weight: (d_k, kernel_size); bias: (d_k,)."""
    assert kernel_size % 2 == 1, "kernel_size must be odd."
    S, B, H, D = x.shape
    crop = (kernel_size - 1) // 2
    BH = B * H
    C = BH * D
    itemsize = x.dtype.itemsize

    # Free, contiguous reshape only -- no HBM transpose / pad passes over x.
    xc = x.reshape(S, C)                                # lanes = flattened B*H*D
    w_kc = jnp.tile(jnp.transpose(weight), (1, BH))     # (K, C): w_kc[j, c] = weight[c % D, j]
    b_c = jnp.tile(bias, (BH,)).reshape(1, C)           # (1, C)
    # TODO(synk): for tiny decode-style S, skip the (K, C)/(1, C) param tiling
    # and replicate the raw (K, D) weights in-kernel instead.

    target_bytes, vmem_cap, multi_tc = _chip_profile()

    # ---- pick (seq, channel) tiles ------------------------------------------
    seq_tiled = False
    ts, tc = S, C
    if seq_block is not None:
        ts = int(seq_block)
        if not (2 * _SUB <= ts <= S and ts % _SUB == 0 and S % ts == 0 and crop <= _SUB):
            raise ValueError("seq_block must be a multiple of 8, >= 16, and divide seq_len.")
        seq_tiled = True
        tc = _pick_channel_tile(ts, C, itemsize, target_bytes)
    else:
        # Seq tiling is only needed when a full-S block at the narrowest
        # (128-lane) channel tile would blow the per-block VMEM budget.
        full_s_min_block = S * min(C, _LANE) * itemsize
        budget = min(4 * target_bytes, vmem_cap // 8)
        if full_s_min_block > budget and S % _SUB == 0 and crop <= _SUB and S >= 4 * _SUB:
            tc = C if C <= _LANE else min(_round_down(C, _LANE), 4 * _LANE)
            max_rows = max(2 * _SUB, _round_down(target_bytes // max(1, tc * itemsize), _SUB))
            ts_try = _pick_seq_tile(S, max_rows)
            if ts_try is not None:
                ts, seq_tiled = ts_try, True
        if not seq_tiled:
            # TODO(synk): sequences that are both huge and have no multiple-of-8
            # divisor fall back to a full-S-resident block and may exceed VMEM.
            ts, tc = S, _pick_channel_tile(S, C, itemsize, target_bytes)

    grid_c = pl.cdiv(C, tc)
    grid_s = (S // ts) if seq_tiled else 1

    # Keep >=2 grid steps only where there are 2 TensorCores to shard onto (v7x).
    if multi_tc and grid_c * grid_s == 1 and C >= 2 * _LANE:
        tc = max(_LANE, _round_down((C + 1) // 2, _LANE))
        grid_c = pl.cdiv(C, tc)

    # ---- scoped-VMEM budget: actual pipeline need, per-chip physical cap -----
    blk = ts * tc * itemsize
    halo = 2 * _SUB * tc * itemsize if seq_tiled else 0
    params = (kernel_size + 1) * tc * max(weight.dtype.itemsize, itemsize)
    need = 2 * (2 * blk + halo + params)                 # double-buffered in + out
    cap = max(48 << 20, min(100 << 20, vmem_cap - (16 << 20)))
    vmem_limit = int(min(cap, max(32 << 20, 2 * need)))
    vmem_limit = int(max(vmem_limit, need + (4 << 20)))

    if seq_tiled:
        tsb = ts // _SUB                                 # seq tile size in 8-row blocks
        nb8 = S // _SUB                                  # total number of 8-row blocks
        kernel = functools.partial(_dwconv_halo_kernel, kernel_size=kernel_size, crop=crop)
        out = pl.pallas_call(
            kernel,
            out_shape=jax.ShapeDtypeStruct((S, C), x.dtype),
            grid_spec=pltpu.PrefetchScalarGridSpec(
                num_scalar_prefetch=0,
                grid=(grid_c, grid_s),
                in_specs=[
                    pl.BlockSpec((ts, tc), lambda c, s: (s, c)),
                    # 8-row halos: last 8 rows of the previous / first 8 rows of
                    # the next seq tile (index clamped at the ends; masked in-kernel).
                    pl.BlockSpec((_SUB, tc), lambda c, s: (jnp.maximum(s * tsb - 1, 0), c)),
                    pl.BlockSpec((_SUB, tc), lambda c, s: (jnp.minimum((s + 1) * tsb, nb8 - 1), c)),
                    pl.BlockSpec((kernel_size, tc), lambda c, s: (0, c)),
                    pl.BlockSpec((1, tc), lambda c, s: (0, c)),
                ],
                out_specs=pl.BlockSpec((ts, tc), lambda c, s: (s, c)),
            ),
            compiler_params=pltpu.CompilerParams(
                dimension_semantics=("parallel", "arbitrary"),
                vmem_limit_bytes=vmem_limit,
            ),
        )(xc, xc, xc, w_kc, b_c)
    else:
        kernel = functools.partial(_dwconv_kernel, kernel_size=kernel_size, crop=crop)
        out = pl.pallas_call(
            kernel,
            out_shape=jax.ShapeDtypeStruct((S, C), x.dtype),
            grid_spec=pltpu.PrefetchScalarGridSpec(
                num_scalar_prefetch=0,
                grid=(grid_c,),
                in_specs=[
                    pl.BlockSpec((S, tc), lambda c: (0, c)),
                    pl.BlockSpec((kernel_size, tc), lambda c: (0, c)),
                    pl.BlockSpec((1, tc), lambda c: (0, c)),
                ],
                out_specs=pl.BlockSpec((S, tc), lambda c: (0, c)),
            ),
            compiler_params=pltpu.CompilerParams(
                dimension_semantics=("parallel",),
                vmem_limit_bytes=vmem_limit,
            ),
        )(xc, w_kc, b_c)

    # Free reshape back to the PyTorch output layout (seq_len, batch, heads, d_k).
    return out.reshape(S, B, H, D)


# --------------------------------------------------------------------------- #
# Reference & self-test
# --------------------------------------------------------------------------- #
def _reference(x, weight, bias, kernel_size=3):
    """Plain-JAX reference (matches the PyTorch module's centered crop)."""
    S = x.shape[0]
    crop = (kernel_size - 1) // 2
    xp = jnp.pad(x, ((crop, crop), (0, 0), (0, 0), (0, 0)))
    out = bias[None, None, None, :]
    for j in range(kernel_size):
        out = out + xp[j:j + S] * weight[:, j][None, None, None, :]
    return out


if __name__ == "__main__":
    kernel_size = 3
    d_k = 32
    key = jax.random.PRNGKey(0)
    kx1, kx2, kw, kb = jax.random.split(key, 4)

    # nn.Conv1d-style init (uniform +/- 1/sqrt(fan_in), fan_in = K for depthwise).
    bound = 1.0 / (kernel_size ** 0.5)
    weight = jax.random.uniform(kw, (d_k, kernel_size), jnp.float32, -bound, bound)
    bias = jax.random.uniform(kb, (d_k,), jnp.float32, -bound, bound)

    # 1) Module-scale shapes: single-seq-tile (roll + mask) path.
    x1 = jax.random.normal(kx1, (8, 2, 4, d_k), dtype=jnp.float32)
    out1 = jax.block_until_ready(
        spatial_depthwise_conv(x1, weight, bias, kernel_size=kernel_size))
    ref1 = _reference(x1, weight, bias, kernel_size)
    assert out1.shape == x1.shape
    assert jnp.allclose(out1, ref1, atol=1e-5, rtol=1e-5), "mismatch (single-tile path)"

    # 2) Longer sequence with forced seq-axis tiling: exercises the halo path.
    x2 = jax.random.normal(kx2, (256, 1, 4, d_k), dtype=jnp.float32)
    out2 = jax.block_until_ready(
        spatial_depthwise_conv(x2, weight, bias, kernel_size=kernel_size, seq_block=64))
    ref2 = _reference(x2, weight, bias, kernel_size)
    assert out2.shape == x2.shape
    assert jnp.allclose(out2, ref2, atol=1e-5, rtol=1e-5), "mismatch (seq-tiled halo path)"

    print("KERNEL_OK")
</pallas_src>

<mosaic_0001>
module attributes {stable_mosaic.version = 11 : i64} {
  func.func @_dwconv_kernel(%arg0: i32, %arg1: memref<8x256xf32, #tpu.memory_space<vmem>>, %arg2: memref<3x256xf32, #tpu.memory_space<vmem>>, %arg3: memref<1x256xf32, #tpu.memory_space<vmem>>, %arg4: memref<8x256xf32, #tpu.memory_space<vmem>>) attributes {dimension_semantics = [#tpu.dimension_semantics<parallel>], iteration_bounds = array<i64: 1>, scalar_prefetch = 0 : i64, scratch_operands = 0 : i64, tpu.core_type = #tpu.core_type<tc>, window_params = [{transform_indices = @transform_0, window_bounds = array<i64: 8, 256>}, {transform_indices = @transform_1, window_bounds = array<i64: 3, 256>}, {transform_indices = @transform_2, window_bounds = array<i64: 1, 256>}, {transform_indices = @transform_3, window_bounds = array<i64: 8, 256>}]} {
    %c0 = arith.constant 0 : index
    %c0_0 = arith.constant 0 : index
    %0 = vector.load %arg1[%c0, %c0_0] : memref<8x256xf32, #tpu.memory_space<vmem>>, vector<8x256xf32>
    %c1 = arith.constant 1 : index
    %c0_1 = arith.constant 0 : index
    %1 = vector.load %arg2[%c1, %c0_1] : memref<3x256xf32, #tpu.memory_space<vmem>>, vector<1x256xf32>
    %2 = vector.shape_cast %1 : vector<1x256xf32> to vector<256xf32>
    %3 = vector.shape_cast %2 : vector<256xf32> to vector<1x256xf32>
    %4 = vector.broadcast %3 : vector<1x256xf32> to vector<8x256xf32>
    %5 = arith.mulf %0, %4 : vector<8x256xf32>
    %c0_2 = arith.constant 0 : index
    %c0_3 = arith.constant 0 : index
    %6 = vector.load %arg3[%c0_2, %c0_3] : memref<1x256xf32, #tpu.memory_space<vmem>>, vector<1x256xf32>
    %7 = vector.broadcast %6 : vector<1x256xf32> to vector<8x256xf32>
    %8 = arith.addf %5, %7 : vector<8x256xf32>
    %9 = tpu.iota {dimensions = array<i32: 0>} : vector<8x1xi32>
    %c1_i32 = arith.constant 1 : i32
    %10 = tpu.dynamic_rotate %0 by %c1_i32 dim 0 : vector<8x256xf32>, i32 -> vector<8x256xf32>
    %c1_i32_4 = arith.constant 1 : i32
    %11 = vector.broadcast %c1_i32_4 : i32 to vector<8x1xi32>
    %12 = arith.cmpi sge, %9, %11 : vector<8x1xi32>
    %c0_5 = arith.constant 0 : index
    %c0_6 = arith.constant 0 : index
    %13 = vector.load %arg2[%c0_5, %c0_6] : memref<3x256xf32, #tpu.memory_space<vmem>>, vector<1x256xf32>
    %14 = vector.shape_cast %13 : vector<1x256xf32> to vector<256xf32>
    %15 = vector.shape_cast %14 : vector<256xf32> to vector<1x256xf32>
    %cst = arith.constant 0.000000e+00 : f32
    %16 = vector.shape_cast %12 : vector<8x1xi1> to vector<8x1xi1>
    %17 = vector.broadcast %16 : vector<8x1xi1> to vector<8x256xi1>
    %18 = vector.broadcast %cst : f32 to vector<8x256xf32>
    %19 = arith.select %17, %10, %18 : vector<8x256xi1>, vector<8x256xf32>
    %20 = vector.broadcast %15 : vector<1x256xf32> to vector<8x256xf32>
    %21 = arith.mulf %19, %20 : vector<8x256xf32>
    %22 = arith.addf %8, %21 : vector<8x256xf32>
    %c7_i32 = arith.constant 7 : i32
    %23 = tpu.dynamic_rotate %0 by %c7_i32 dim 0 : vector<8x256xf32>, i32 -> vector<8x256xf32>
    %c7_i32_7 = arith.constant 7 : i32
    %24 = vector.broadcast %c7_i32_7 : i32 to vector<8x1xi32>
    %25 = arith.cmpi slt, %9, %24 : vector<8x1xi32>
    %c2 = arith.constant 2 : index
    %c0_8 = arith.constant 0 : index
    %26 = vector.load %arg2[%c2, %c0_8] : memref<3x256xf32, #tpu.memory_space<vmem>>, vector<1x256xf32>
    %27 = vector.shape_cast %26 : vector<1x256xf32> to vector<256xf32>
    %28 = vector.shape_cast %27 : vector<256xf32> to vector<1x256xf32>
    %cst_9 = arith.constant 0.000000e+00 : f32
    %29 = vector.shape_cast %25 : vector<8x1xi1> to vector<8x1xi1>
    %30 = vector.broadcast %29 : vector<8x1xi1> to vector<8x256xi1>
    %31 = vector.broadcast %cst_9 : f32 to vector<8x256xf32>
    %32 = arith.select %30, %23, %31 : vector<8x256xi1>, vector<8x256xf32>
    %33 = vector.broadcast %28 : vector<1x256xf32> to vector<8x256xf32>
    %34 = arith.mulf %32, %33 : vector<8x256xf32>
    %35 = arith.addf %22, %34 : vector<8x256xf32>
    %c0_10 = arith.constant 0 : index
    %c0_11 = arith.constant 0 : index
    %36 = vector.load %arg4[%c0_10, %c0_11] : memref<8x256xf32, #tpu.memory_space<vmem>>, vector<8x256xf32>
    tpu.vector_store %arg4[%c0_10, %c0_11], %35 {strides = array<i32>} : memref<8x256xf32, #tpu.memory_space<vmem>>, vector<8x256xf32>,
    return
  }
  func.func @transform_0(%arg0: i32) -> (i32, i32) {
    %c0_i32 = arith.constant 0 : i32
    %c0_i32_0 = arith.constant 0 : i32
    return %c0_i32, %arg0 : i32, i32
  }
  func.func @transform_1(%arg0: i32) -> (i32, i32) {
    %c0_i32 = arith.constant 0 : i32
    %c0_i32_0 = arith.constant 0 : i32
    return %c0_i32, %arg0 : i32, i32
  }
  func.func @transform_2(%arg0: i32) -> (i32, i32) {
    %c0_i32 = arith.constant 0 : i32
    %c0_i32_0 = arith.constant 0 : i32
    return %c0_i32, %arg0 : i32, i32
  }
  func.func @transform_3(%arg0: i32) -> (i32, i32) {
    %c0_i32 = arith.constant 0 : i32
    %c0_i32_0 = arith.constant 0 : i32
    return %c0_i32, %arg0 : i32, i32
  }
}

</mosaic_0001>

<llo_original>
// kernel: tile.19
$region0: #{tile.19}
  %s0 = inlined_call_operand.vmem [shape: f32[8,32], index: 0, kind: input, shape index: {}]
  %s1 = inlined_call_operand.vmem [shape: f32[1,256], index: 1, kind: output, shape index: {}]
  $region1: #{tile.19} parent=0
    #allocation0 [shape = 'u8[8192]{0}', space=vmem, size = 0x2000, scoped, tag = 'scoped mem for output reshape']
    %s2 = smov 3
    %v3 = vld [vmem:[%s0] ss:$4 sm:%s2]
    %vm4 = vcmask 261120
    %5 = vst.msk [vmem:[#allocation0] ss:$8 sm:$0x3] %vm4, %v3
    %s6 = scalar_lea.vmem %s0, 3
    %s7 = smov 3
    %v8 = vld [vmem:[%s6] ss:$4 sm:%s7]
    %9 = vrot.lane.b32.xlu0 %v8, 96
    %v10 = vpop.permute.xlu0 %9
    %vm11 = vcmask 1048320
    %12 = vst.msk [vmem:[#allocation0] ss:$8 sm:$0x3] %vm11, %v10
    %s13 = scalar_lea.vmem %s0, 2
    %s14 = smov 3
    %v15 = vld [vmem:[%s13] ss:$4 sm:%s14]
    %16 = vrot.lane.b32.xlu0 %v15, 64
    %v17 = vpop.permute.xlu0 %16
    %vm18 = vcmask 785920
    %19 = vst.msk [vmem:[#allocation0] ss:$8 sm:$0x3] %vm18, %v17
    %s20 = scalar_lea.vmem %s0, 1
    %s21 = smov 3
    %v22 = vld [vmem:[%s20] ss:$4 sm:%s21]
    %23 = vrot.lane.b32.xlu0 %v22, 32
    %v24 = vpop.permute.xlu0 %23
    %vm25 = vcmask 523520
    %26 = vst.msk [vmem:[#allocation0] ss:$8 sm:$0x3] %vm25, %v24
    %s28 = ssub.s32 2, 1
    %v29 = vld [vmem:[#allocation0] sm:%s28]
    %s31 = ssub.s32 2, 1
    %32 = vst [vmem:[%s1] sm:%s31] %v29
    %s33 = scalar_lea.vmem [#allocation0], 8
    %v34 = vld [vmem:[%s33] sm:%s28]
    %s36 = ssub.s32 2, 1
    %s37 = scalar_lea.vmem %s1, 1
    %38 = vst [vmem:[%s37] sm:%s36] %v34

// kernel: tile.18
$region0: #{tile.18}
  #allocation0 [shape = 's32[1]{0}', space=sflag, size = 0x4, scoped, tag = 'scoped memory for tile.18']
  %s0 = inlined_call_operand.vmem [shape: f32[32], index: 0, kind: input, shape index: {}]
  %s1 = inlined_call_operand.vmem [shape: f32[8,32], index: 1, kind: output, shape index: {}]
  // Predicated region
  $region2: #{tile.18} parent=0 // pred_check
    _
  $region3: #{tile.18} parent=0 // pred_check_branch
    %3 = sbr.rel (0) target = $region5
  $region4: #{tile.18} parent=0 // pred_region
    _
  $region5: #{tile.18} parent=0 // pred_fallthru
    _
  %v4 = vld [vmem:[%s0] ss:$0 sm:$0xff]
  %5 = vst [vmem:[%s1] sm:$0xff] %v4

// kernel: tile.14
$region0: #{tile.14}
  %s0 = inlined_call_operand.vmem [shape: f32[3,8,32], index: 0, kind: input, shape index: {}]
  %s1 = inlined_call_operand.vmem [shape: f32[3,256], index: 1, kind: output, shape index: {}]
  $region1: #{tile.14} parent=0
    #allocation0 [shape = 'u8[8192]{0}', space=vmem, size = 0x2000, scoped, tag = 'scoped mem for output reshape']
    %v2 = vld [vmem:[%s0] ss:$4 sm:$0x3f]
    %vm3 = vcmask 261120
    %4 = vst.msk [vmem:[#allocation0] ss:$8 sm:$0x3] %vm3, %v2
    %s5 = scalar_lea.vmem [#allocation0], 4294967281
    %6 = vst.msk [vmem:[%s5] ss:$8 sm:$0xc] %vm3, %v2
    %s7 = scalar_lea.vmem [#allocation0], 4294967266
    %8 = vst.msk [vmem:[%s7] ss:$8 sm:$0x30] %vm3, %v2
    %s9 = scalar_lea.vmem %s0, 3
    %v10 = vld [vmem:[%s9] ss:$8 sm:$0x7]
    %s11 = scalar_lea.vmem %s0, 4294967279
    %v12 = vld [vmem:[%s11] ss:$8 sm:$0x38]
    %vm13 = vcmask 1045507
    %v14 = vsel %vm13, %v12, %v10
    %15 = vrot.lane.b32.xlu0 %v14, 96
    %v16 = vpop.permute.xlu0 %15
    %vm17 = vcmask 1048320
    %18 = vst.msk [vmem:[#allocation0] sm:$0x7] %vm17, %v16
    %s19 = scalar_lea.vmem [#allocation0], 5
    %20 = vst.msk [vmem:[%s19] sm:$0x38] %vm17, %v16
    %s21 = scalar_lea.vmem %s0, 2
    %v22 = vld [vmem:[%s21] ss:$8 sm:$0x7]
    %s23 = scalar_lea.vmem %s0, 4294967278
    %v24 = vld [vmem:[%s23] ss:$8 sm:$0x38]
    %vm25 = vcmask 1045507
    %v26 = vsel %vm25, %v24, %v22
    %27 = vrot.lane.b32.xlu0 %v26, 64
    %v28 = vpop.permute.xlu0 %27
    %vm29 = vcmask 785920
    %30 = vst.msk [vmem:[#allocation0] sm:$0x7] %vm29, %v28
    %s31 = scalar_lea.vmem [#allocation0], 5
    %32 = vst.msk [vmem:[%s31] sm:$0x38] %vm29, %v28
    %s33 = scalar_lea.vmem %s0, 1
    %v34 = vld [vmem:[%s33] ss:$8 sm:$0x7]
    %s35 = scalar_lea.vmem %s0, 4294967277
    %v36 = vld [vmem:[%s35] ss:$8 sm:$0x38]
    %vm37 = vcmask 1045507
    %v38 = vsel %vm37, %v36, %v34
    %39 = vrot.lane.b32.xlu0 %v38, 32
    %v40 = vpop.permute.xlu0 %39
    %vm41 = vcmask 523520
    %42 = vst.msk [vmem:[#allocation0] sm:$0x7] %vm41, %v40
    %s43 = scalar_lea.vmem [#allocation0], 5
    %44 = vst.msk [vmem:[%s43] sm:$0x38] %vm41, %v40
    %s46 = ssub.s32 16, 1
    %v47 = vld [vmem:[#allocation0] sm:%s46]
    %s49 = ssub.s32 16, 1
    %50 = vst [vmem:[%s1] sm:%s49] %v47
    %s51 = scalar_lea.vmem [#allocation0], 8
    %v52 = vld [vmem:[%s51] sm:%s46]
    %s54 = ssub.s32 16, 1
    %s55 = scalar_lea.vmem %s1, 4
    %56 = vst [vmem:[%s55] sm:%s54] %v52

// kernel: spatial_depthwise_conv.1
$region0: #{spatial_depthwise_conv.1}
  #allocation0 [shape = 'u32[]', space=smem, size = 0x4, offset = 0x4, fixed_abs, tag = 'smem constant byte address 0x4 - core index']
  #allocation1 [shape = 'u32[72,128]{1,0:T(1,128)}', space=vmem, size = 0x9000, scoped, tag = 'internal scratch']
  %s0 = inlined_call_operand.vmem [shape: f32[8,256], index: 0, kind: input, shape index: {}]
  %s1 = inlined_call_operand.vmem [shape: f32[3,256], index: 1, kind: input, shape index: {}]
  %s2 = inlined_call_operand.vmem [shape: f32[1,256], index: 2, kind: input, shape index: {}]
  %s3 = inlined_call_operand.vmem [shape: f32[8,256], index: 3, kind: output, shape index: {}]
  %s4 = sld [smem:[#allocation0]]
  $region22: #{spatial_depthwise_conv.1} parent=0
    _
  %s6 = ssub.s32 1, %s4
  %s7 = scalar_select 0, %s6, %s4
  // Predicated region
  $region2: #{spatial_depthwise_conv.1} parent=0 // pred_check
    _
  $region3: #{spatial_depthwise_conv.1} parent=0 // pred_check_branch
    %9 = sbr.rel (0) target = $region5
  $region4: #{spatial_depthwise_conv.1} parent=0 // pred_region
    _
  $region5: #{spatial_depthwise_conv.1} parent=0 // pred_fallthru
    _
  // Predicated region
  $region6: #{spatial_depthwise_conv.1} parent=0 // pred_check
    _
  $region7: #{spatial_depthwise_conv.1} parent=0 // pred_check_branch
    %11 = sbr.rel (0) target = $region9
  $region8: #{spatial_depthwise_conv.1} parent=0 // pred_region
    _
  $region9: #{spatial_depthwise_conv.1} parent=0 // pred_fallthru
    _
  // Predicated region
  $region10: #{spatial_depthwise_conv.1} parent=0 // pred_check
    _
  $region11: #{spatial_depthwise_conv.1} parent=0 // pred_check_branch
    %13 = sbr.rel (0) target = $region13
  $region12: #{spatial_depthwise_conv.1} parent=0 // pred_region
    _
  $region13: #{spatial_depthwise_conv.1} parent=0 // pred_fallthru
    _
  %v14 = vld [vmem:[%s0] sm:$0xff]
  %v15 = vld [vmem:[%s0 + $0x8] sm:$0xff]
  %s16 = scalar_lea.vmem %s1, 1
  %v17 = vld [vmem:[%s16] ss:$4 sm:$0x3]
  %v19 = vperm.slane %v17, 0
  %v20 = vperm.slane %v17, 1
  %v23 = vmul.f32 %v14, %v19
  %v24 = vmul.f32 %v15, %v20
  %v25 = vld [vmem:[%s2] sm:$0x3]
  %v27 = vperm.slane %v25, 0
  %v28 = vperm.slane %v25, 1
  %v31 = vadd.f32 %v23, %v27
  %v32 = vadd.f32 %v24, %v28
  %v33 = vlaneseq
  %v34 = vshrl.u32 %v33, 7
  %v35 = vrot.slane %v14, 7
  %v36 = vrot.slane %v15, 7
  %vm37 = vcmp.ge.s32.totalorder %v34, 1
  %v38 = vld [vmem:[%s1] ss:$4 sm:$0x3]
  %v39 = vsel %vm37, 1, 0
  %vm40 = vcmp.eq.s32.totalorder %v39, 1
  %v41 = vsel %vm40, %v35, 0.0
  %v42 = vsel %vm40, %v36, 0.0
  %v44 = vperm.slane %v38, 0
  %v45 = vperm.slane %v38, 1
  %v48 = vmul.f32 %v41, %v44
  %v49 = vmul.f32 %v42, %v45
  %v50 = vadd.f32 %v31, %v48
  %v51 = vadd.f32 %v32, %v49
  %v52 = vrot.slane %v14, 1
  %v53 = vrot.slane %v15, 1
  %vm54 = vcmp.lt.s32.totalorder %v34, 7
  %s55 = scalar_lea.vmem %s1, 2
  %v56 = vld [vmem:[%s55] ss:$4 sm:$0x3]
  %v57 = vsel %vm54, 1, 0
  %vm58 = vcmp.eq.s32.totalorder %v57, 1
  %v59 = vsel %vm58, %v52, 0.0
  %v60 = vsel %vm58, %v53, 0.0
  %v62 = vperm.slane %v56, 0
  %v63 = vperm.slane %v56, 1
  %v66 = vmul.f32 %v59, %v62
  %v67 = vmul.f32 %v60, %v63
  %v68 = vadd.f32 %v50, %v66
  %v69 = vadd.f32 %v51, %v67
  %70 = vst [vmem:[%s3] sm:$0xff] %v68
  %71 = vst [vmem:[%s3 + $0x8] sm:$0xff] %v69
  // Predicated region
  $region14: #{spatial_depthwise_conv.1} parent=0 // pred_check
    _
  $region15: #{spatial_depthwise_conv.1} parent=0 // pred_check_branch
    %73 = sbr.rel (0) target = $region17
  $region16: #{spatial_depthwise_conv.1} parent=0 // pred_region
    _
  $region17: #{spatial_depthwise_conv.1} parent=0 // pred_fallthru
    _
  // Predicated region
  $region18: #{spatial_depthwise_conv.1} parent=0 // pred_check
    _
  $region19: #{spatial_depthwise_conv.1} parent=0 // pred_check_branch
    %75 = sbr.rel (0) target = $region21
  $region20: #{spatial_depthwise_conv.1} parent=0 // pred_region
    _
  $region21: #{spatial_depthwise_conv.1} parent=0 // pred_fallthru
    _

</llo_original>
